<compile_context>
chip_gen: v5e
topology: v5e:2x2
jax: 0.10.0
libtpu: 0.0.40
codegen_flags: <defaults>
</compile_context>

<pallas_src>
import functools

import jax
import jax.numpy as jnp
from jax.experimental import pallas as pl
from jax.experimental.pallas import tpu as pltpu


_INFLIGHT = 8  # outstanding row-gather DMAs per tile (HBM-gather path)


def _round_up(v, m):
    return ((v + m - 1) // m) * m


def _vmem_capacity_bytes():
    """Per-core VMEM capacity; conservative fallback if the query fails."""
    try:
        info = pltpu.get_tpu_info()
        cap = getattr(info, "vmem_capacity_bytes", None)
        if cap:
            return int(cap)
    except Exception:
        pass
    return 64 * 1024 * 1024  # v7x per-core VMEM (smallest of the targets)


# ---------------------------------------------------------------------------
# Fast path: table resident in VMEM, gather via one-hot @ table on the MXU.
# ---------------------------------------------------------------------------
def _embed_onehot_kernel(ids_ref, table_ref, out_ref):
    tb = out_ref.shape[0]
    vocabs = table_ref.shape[0]
    ids = ids_ref[...]                                            # (tb, 1) int32
    vocab_iota = jax.lax.broadcasted_iota(jnp.int32, (tb, vocabs), 1)
    onehot = (ids == vocab_iota).astype(table_ref.dtype)          # (tb, vocabs)
    out_ref[...] = jnp.dot(
        onehot, table_ref[...], preferred_element_type=jnp.float32
    ).astype(out_ref.dtype)


def _embed_resident_call(flat_ids, table, tb, num_tiles, vmem_limit):
    vocabs, n_emb = table.shape
    n_pad = num_tiles * tb
    ids2d = flat_ids.reshape(n_pad, 1)

    params = {"dimension_semantics": ("parallel",)}
    if vmem_limit is not None:
        params["vmem_limit_bytes"] = int(vmem_limit)

    return pl.pallas_call(
        _embed_onehot_kernel,
        out_shape=jax.ShapeDtypeStruct((n_pad, n_emb), table.dtype),
        grid=(num_tiles,),
        in_specs=[
            # Per-tile ids: (tb, 1) — last dim equals full array dim.
            pl.BlockSpec((tb, 1), lambda i: (i, 0)),
            # Whole table, constant block index -> fetched from HBM once and
            # kept resident in VMEM across all grid steps.
            pl.BlockSpec((vocabs, n_emb), lambda i: (0, 0)),
        ],
        out_specs=pl.BlockSpec((tb, n_emb), lambda i: (i, 0)),
        compiler_params=pltpu.CompilerParams(**params),
    )(ids2d, table)


# ---------------------------------------------------------------------------
# General path: table in HBM, manual per-row gather DMAs (sliding window).
# ---------------------------------------------------------------------------
def _embed_hbm_kernel(ids_ref, table_hbm, out_ref, buf, sems):
    i = pl.program_id(0)
    tb = buf.shape[0]
    w = sems.shape[0]
    base = i * tb

    def _row_copy(src_row, dst_row, slot):
        return pltpu.make_async_copy(
            table_hbm.at[pl.ds(src_row, 1), :],
            buf.at[pl.ds(dst_row, 1), :],
            sems.at[slot],
        )

    # Issue one row-gather DMA per token, keeping up to `w` in flight.
    @pl.loop(0, tb)
    def _issue(t):
        slot = t % w

        @pl.when(t >= w)
        def _():
            # Free this semaphore slot: wait for the copy issued w steps ago
            # (same byte count for every row copy, so any row descriptor works).
            _row_copy(0, 0, slot).wait()

        _row_copy(ids_ref[base + t], t, slot).start()

    # Drain the remaining outstanding copies (one pending per used slot).
    @pl.loop(0, min(w, tb))
    def _drain(s):
        _row_copy(0, 0, s).wait()

    # Single dense (tb, n_emb) store -> one large writeback DMA.
    out_ref[...] = buf[...]


def _embed_hbm_call(flat_ids, table, tb, num_tiles):
    vocabs, n_emb = table.shape
    n_pad = num_tiles * tb

    return pl.pallas_call(
        _embed_hbm_kernel,
        out_shape=jax.ShapeDtypeStruct((n_pad, n_emb), table.dtype),
        grid_spec=pltpu.PrefetchScalarGridSpec(
            num_scalar_prefetch=1,              # flat ids -> SMEM
            grid=(num_tiles,),
            in_specs=[pl.BlockSpec(memory_space=pl.ANY)],   # table stays in HBM
            out_specs=pl.BlockSpec((tb, n_emb), lambda i, ids: (i, 0)),
            scratch_shapes=[
                pltpu.VMEM((tb, n_emb), table.dtype),
                pltpu.SemaphoreType.DMA((_INFLIGHT,)),
            ],
        ),
        compiler_params=pltpu.CompilerParams(
            dimension_semantics=("parallel",)
        ),
    )(flat_ids, table)


# ---------------------------------------------------------------------------
# Wrapper: pad/tile tokens, pick strategy by VMEM budget.
# ---------------------------------------------------------------------------
def word_embeddings(x, table, *, token_block=128, force_hbm_gather=False):
    """Pallas equivalent of nn.Embedding(vocabs, n_emb)(x)."""
    vocabs, n_emb = table.shape
    orig_shape = x.shape

    flat = x.reshape(-1).astype(jnp.int32)
    n = int(flat.shape[0])
    # TODO(synk): torch nn.Embedding raises on out-of-range ids; we clamp.
    flat = jnp.clip(flat, 0, vocabs - 1)

    # Token tile: multiple of 8 (sublane-dense), no bigger than needed.
    tb = min(_round_up(token_block, 8), _round_up(max(n, 1), 8))
    n_pad = _round_up(n, tb)
    if n_pad != n:
        flat = jnp.pad(flat, (0, n_pad - n))
    num_tiles = n_pad // tb

    # VMEM budget for the table-resident fast path (generation-aware).
    itemsize = jnp.dtype(table.dtype).itemsize
    table_bytes = vocabs * n_emb * itemsize
    resident_budget = (
        table_bytes
        + 2 * tb * n_emb * itemsize          # double-buffered output tiles
        + 2 * tb * 128 * 4                   # double-buffered id tiles (lane pad)
        + tb * max(vocabs, 128) * 4          # one-hot intermediate
        + (2 << 20)                          # slack
    )
    vmem_cap = _vmem_capacity_bytes()
    use_resident = resident_budget <= int(0.4 * min(vmem_cap, 128 * 1024 * 1024))

    vmem_limit = None
    if use_resident and resident_budget > 12 * 1024 * 1024:
        # v5e default scoped limit is only 16 MiB; raise it for big tables.
        vmem_limit = min(int(0.9 * vmem_cap), int(resident_budget) + (8 << 20))

    if use_resident and not force_hbm_gather:
        out_flat = _embed_resident_call(flat, table, tb, num_tiles, vmem_limit)
    else:
        out_flat = _embed_hbm_call(flat, table, tb, num_tiles)

    return out_flat[:n].reshape(*orig_shape, n_emb)


if __name__ == "__main__":
    # Small shapes consistent with the module: vocabs=32, n_emb=128,
    # batch=2, seq=8.
    vocabs, n_emb = 32, 128
    batch, seq = 2, 8

    key = jax.random.PRNGKey(0)
    k_table, k_ids = jax.random.split(key)

    # nn.Embedding default init: weight ~ N(0, 1)
    table = jax.random.normal(k_table, (vocabs, n_emb), dtype=jnp.float32)
    x = jax.random.randint(k_ids, (batch, seq), 0, vocabs, dtype=jnp.int32)

    ref = table[x]

    # Default (auto-selected) path — small table -> resident-in-VMEM fast path.
    out = jax.block_until_ready(word_embeddings(x, table))
    assert out.shape == (batch, seq, n_emb)
    assert jnp.allclose(out, ref), "resident-path embedding mismatch vs reference"

    # Also exercise the large-table HBM manual-gather path on the same data.
    out_hbm = jax.block_until_ready(word_embeddings(x, table, force_hbm_gather=True))
    assert jnp.allclose(out_hbm, ref), "HBM-gather embedding mismatch vs reference"

    print("KERNEL_OK")
</pallas_src>

<mosaic_0001>
module attributes {stable_mosaic.version = 11 : i64} {
  func.func @_embed_onehot_kernel(%arg0: i32, %arg1: memref<16x1xi32, #tpu.memory_space<vmem>>, %arg2: memref<32x128xf32, #tpu.memory_space<vmem>>, %arg3: memref<16x128xf32, #tpu.memory_space<vmem>>) attributes {dimension_semantics = [#tpu.dimension_semantics<parallel>], iteration_bounds = array<i64: 1>, scalar_prefetch = 0 : i64, scratch_operands = 0 : i64, tpu.core_type = #tpu.core_type<tc>, window_params = [{transform_indices = @transform_0, window_bounds = array<i64: 16, 1>}, {pipeline_mode = #tpu.pipeline_mode<synchronous>, transform_indices = @transform_1, window_bounds = array<i64: 32, 128>}, {transform_indices = @transform_2, window_bounds = array<i64: 16, 128>}]} {
    %c0 = arith.constant 0 : index
    %c0_0 = arith.constant 0 : index
    %0 = vector.load %arg1[%c0, %c0_0] : memref<16x1xi32, #tpu.memory_space<vmem>>, vector<16x1xi32>
    %1 = tpu.iota {dimensions = array<i32: 1>} : vector<16x32xi32>
    %2 = vector.broadcast %0 : vector<16x1xi32> to vector<16x32xi32>
    %3 = arith.cmpi eq, %2, %1 : vector<16x32xi32>
    %4 = arith.extui %3 : vector<16x32xi1> to vector<16x32xi32>
    %5 = arith.sitofp %4 : vector<16x32xi32> to vector<16x32xf32>
    %c0_1 = arith.constant 0 : index
    %c0_2 = arith.constant 0 : index
    %6 = vector.load %arg2[%c0_1, %c0_2] : memref<32x128xf32, #tpu.memory_space<vmem>>, vector<32x128xf32>
    %cst = arith.constant dense<0.000000e+00> : vector<16x128xf32>
    %7 = tpu.matmul %5, %6, %cst {dimension_numbers = #tpu.dot_dimension_numbers<[1], [0], [0], [1], [0, 0, 1, 1], [], []>} : vector<16x32xf32>, vector<32x128xf32>, vector<16x128xf32> -> vector<16x128xf32>
    %c0_3 = arith.constant 0 : index
    %c0_4 = arith.constant 0 : index
    %8 = vector.load %arg3[%c0_3, %c0_4] : memref<16x128xf32, #tpu.memory_space<vmem>>, vector<16x128xf32>
    tpu.vector_store %arg3[%c0_3, %c0_4], %7 {strides = array<i32>} : memref<16x128xf32, #tpu.memory_space<vmem>>, vector<16x128xf32>,
    return
  }
  func.func @transform_0(%arg0: i32) -> (i32, i32) {
    %c0_i32 = arith.constant 0 : i32
    %c0_i32_0 = arith.constant 0 : i32
    return %arg0, %c0_i32 : i32, i32
  }
  func.func @transform_1(%arg0: i32) -> (i32, i32) {
    %c0_i32 = arith.constant 0 : i32
    %c0_i32_0 = arith.constant 0 : i32
    %c0_i32_1 = arith.constant 0 : i32
    return %c0_i32, %c0_i32_0 : i32, i32
  }
  func.func @transform_2(%arg0: i32) -> (i32, i32) {
    %c0_i32 = arith.constant 0 : i32
    %c0_i32_0 = arith.constant 0 : i32
    return %arg0, %c0_i32 : i32, i32
  }
}

</mosaic_0001>

<llo_original>
// kernel: tpu_custom_call.1
$region0: #{tpu_custom_call.1}
  #allocation0 [shape = 'u32[]', space=smem, size = 0x4, offset = 0x4, fixed_abs, tag = 'smem constant byte address 0x4 - core index']
  #allocation1 [shape = 'u32[72,128]{1,0:T(1,128)}', space=vmem, size = 0x9000, scoped, tag = 'internal scratch']
  %s0 = inlined_call_operand.vmem [shape: s32[16,1], index: 0, kind: input, shape index: {}]
  %s1 = inlined_call_operand.hbm [shape: f32[32,128], index: 1, kind: input, shape index: {}]
  %s2 = inlined_call_operand.hbm [shape: f32[16,128], index: 2, kind: output, shape index: {}]
  %s3 = sld [smem:[#allocation0]]
  $region22: #{tpu_custom_call.1} parent=0
    _
  %s5 = ssub.s32 1, %s3
  %s6 = scalar_select 0, %s5, %s3
  $region1: #{tpu_custom_call.1} parent=0
    #allocation2 [shape = 'u8[16384]{0}', space=vmem, size = 0x4000, scoped, tag = 'input window, operand 1, single buffered']
    #allocation3 [shape = 's32[1]{0}', space=sflag, size = 0x4, scoped, tag = 'scoped memory for tpu_custom_call.1']
    #allocation4 [shape = 's32[1]{0}', space=sflag, size = 0x4, scoped, tag = 'scoped memory for tpu_custom_call.1']
    #allocation5 [shape = 'u8[8192]{0}', space=vmem, size = 0x2000, scoped, tag = 'output window, operand 0, single buffered']
    %7 = vsyncpa [#allocation3], 0
    %8 = vsyncpa [#allocation4], 0
    // Predicated region
    $region2: #{tpu_custom_call.1} parent=1 // pred_check
      _
    $region3: #{tpu_custom_call.1} parent=1 // pred_check_branch
      %10 = sbr.rel (0) target = $region5
    $region4: #{tpu_custom_call.1} parent=1 // pred_region
      _
    $region5: #{tpu_custom_call.1} parent=1 // pred_fallthru
      _
    // Predicated region
    $region6: #{tpu_custom_call.1} parent=1 // pred_check
      _
    $region7: #{tpu_custom_call.1} parent=1 // pred_check_branch
      %12 = sbr.rel (0) target = $region9
    $region8: #{tpu_custom_call.1} parent=1 // pred_region
      %14 = vsyncadd [#allocation3], 0
      %s15 = sshll.u32 %s1, 4
      %s16 = int_to_ptr.hbm [resolvable:$true] %s15
      %s17 = sshll.u32 [#allocation2], 4
      %s18 = int_to_ptr.vmem [resolvable:$true] %s17
      %23 = dma.hbm_to_vmem [thread:$0]  %s16, 512, %s18, [#allocation3], 128, 128, 8
    $region9: #{tpu_custom_call.1} parent=1 // pred_fallthru
      _
    // Predicated region
    $region10: #{tpu_custom_call.1} parent=1 // pred_check
      _
    $region11: #{tpu_custom_call.1} parent=1 // pred_check_branch
      %25 = sbr.rel (0) target = $region13
    $region12: #{tpu_custom_call.1} parent=1 // pred_region
      %27 = dma.done [#allocation3], 512
    $region13: #{tpu_custom_call.1} parent=1 // pred_fallthru
      _
    %v28 = vld [vmem:[%s0] sm:$0xff]
    %v29 = vld [vmem:[%s0 + $0x8] sm:$0xff]
    %v30 = vlaneseq
    %v31 = vand.u32 %v30, 127
    %32 = vset.pattern.permute.xlu0 0
    %33 = vperm.xlu0 %32, %v28
    %v34 = vpop.permute.xlu0 %33
    %35 = vset.pattern.permute.xlu0 0
    %36 = vperm.xlu0 %35, %v29
    %v37 = vpop.permute.xlu0 %36
    %vm38 = vcmp.eq.s32.totalorder %v34, %v31
    %vm39 = vcmp.eq.s32.totalorder %v37, %v31
    %v40 = vsel %vm38, 1, 0
    %v41 = vsel %vm39, 1, 0
    %v42 = vcvt.s32.f32 %v40
    %v43 = vcvt.s32.f32 %v41
    %v44 = vld [vmem:[#allocation2] sm:$0xff]
    %v45 = vld [vmem:[#allocation2 + $0x8] sm:$0xff]
    %v46 = vld [vmem:[#allocation2 + $0x10] sm:$0xff]
    %v47 = vld [vmem:[#allocation2 + $0x18] sm:$0xff]
    %vm48 = vcmask 261120
    %v50 = vsel %vm48, %v42, 0
    %v53 = vsel %vm48, %v43, 0
    %55 = vmatpush.msra.mxu0 0.0
    %56 = vmatpush.msra.mxu0 0.0
    %57 = vmatpush.msra.mxu0 0.0
    %58 = vmatpush.msra.mxu0 0.0
    %59 = vmatpush.msra.mxu0 0.0
    %60 = vmatpush.msra.mxu0 0.0
    %61 = vmatpush.msra.mxu0 0.0
    %62 = vmatpush.msra.mxu0 0.0
    %63 = vmatpush.msra.mxu0 0.0
    %64 = vmatpush.msra.mxu0 0.0
    %65 = vmatpush.msra.mxu0 0.0
    %66 = vmatpush.msra.mxu0 0.0
    %67 = vmatpush.msra.mxu0 %v47
    %68 = vmatpush.msra.mxu0 %v46
    %69 = vmatpush.msra.mxu0 %v45
    %70 = vmatpush.msra.mxu0 %v44
    %71 = vmatmul.f32.gmra.mxu0 %v50
    %v72 = vpop.f32.mrf.mxu0
    %v73 = vadd.f32 0.0, %v72
    %74 = vmatmul.f32.gmra.mxu0 %v53
    %v75 = vpop.f32.mrf.mxu0
    %v76 = vadd.f32 0.0, %v75
    %77 = vdwg.mxu0
    %78 = vst [vmem:[#allocation5] sm:$0xff] %v73
    %79 = vst [vmem:[#allocation5 + $0x8] sm:$0xff] %v76
    // Predicated region
    $region14: #{tpu_custom_call.1} parent=1 // pred_check
      _
    $region15: #{tpu_custom_call.1} parent=1 // pred_check_branch
      %81 = sbr.rel (0) target = $region17
    $region16: #{tpu_custom_call.1} parent=1 // pred_region
      %83 = vsyncadd [#allocation4], 0
      %s84 = sshll.u32 [#allocation5], 4
      %s85 = int_to_ptr.vmem [resolvable:$true] %s84
      %s86 = sshll.u32 %s2, 4
      %s87 = int_to_ptr.hbm [resolvable:$true] %s86
      %92 = dma.vmem_to_hbm [thread:$0]  %s85, 256, %s87, [#allocation4], 128, 128, 8
    $region17: #{tpu_custom_call.1} parent=1 // pred_fallthru
      _
    // Predicated region
    $region18: #{tpu_custom_call.1} parent=1 // pred_check
      _
    $region19: #{tpu_custom_call.1} parent=1 // pred_check_branch
      %94 = sbr.rel (0) target = $region21
    $region20: #{tpu_custom_call.1} parent=1 // pred_region
      %96 = dma.done [#allocation4], 256
    $region21: #{tpu_custom_call.1} parent=1 // pred_fallthru
      _
    %97 = vsyncpa [#allocation3], 1
    %98 = vsyncpa [#allocation4], 1

</llo_original>
